<compile_context>
chip_gen: v7x
topology: tpu7x:2x2x1
jax: 0.10.0
libtpu: 0.0.40
codegen_flags: <defaults>
</compile_context>

<pallas_src>
import numpy as np
import jax
import jax.numpy as jnp
from jax import lax
from jax.experimental import pallas as pl
from jax.experimental.pallas import tpu as pltpu


def _subgraph_edge_kernel(e1_ref, e2_ref, r_ref, packed_ref,
                          src_ref, dst_ref, typ_ref,
                          keep_ref, new_src_ref, new_dst_ref, new_attr_ref,
                          cmp_src_vmem, cmp_dst_vmem):
    # Grid: (E // TE, B // TB); axis 0 = edge tile (outer, parallel),
    #       axis 1 = query-batch tile (inner, arbitrary).
    n_nodes = packed_ref.shape[1]
    te = src_ref.shape[1]

    src = src_ref[...]          # [1, TE] int32 (global node id of edge source)
    dst = dst_ref[...]          # [1, TE] int32
    typ = typ_ref[...]          # [1, TE] int32

    # Build the [N, TE] endpoint one-hots once per edge tile; reused by every
    # query-batch block of this tile (amortized over B // TB inner steps).
    @pl.when(pl.program_id(1) == 0)
    def _():
        node_iota = lax.broadcasted_iota(jnp.int32, (n_nodes, te), 0)
        cmp_src_vmem[...] = (node_iota == src).astype(jnp.float32)
        cmp_dst_vmem[...] = (node_iota == dst).astype(jnp.float32)

    # packed[b, n] = n_mask[b, n] * (N + 1) + (cumsum(n_mask[b])[n] - 1)
    #   member     -> N + 1 + relabel_index   (>= N + 1)
    #   non-member -> cumsum - 1              (<= N - 2)
    # One f32 gather per endpoint recovers both membership and relabel index.
    packed = packed_ref[...]                                     # [TB, N] f32
    g_src = jnp.dot(packed, cmp_src_vmem[...],
                    preferred_element_type=jnp.float32)          # [TB, TE]
    g_dst = jnp.dot(packed, cmp_dst_vmem[...],
                    preferred_element_type=jnp.float32)          # [TB, TE]

    thresh = jnp.float32(n_nodes)
    mem_src = g_src >= thresh
    mem_dst = g_dst >= thresh
    idx_src = (g_src - jnp.float32(n_nodes + 1)).astype(jnp.int32)
    idx_dst = (g_dst - jnp.float32(n_nodes + 1)).astype(jnp.int32)

    # Query-edge removal (remove_query_edge=True): drop every edge matching
    # (e1, e2, r) of that row's query.
    e1 = e1_ref[...]            # [TB, 1] int32
    e2 = e2_ref[...]            # [TB, 1] int32
    rq = r_ref[...]             # [TB, 1] int32
    qmask = (src == e1) & (dst == e2) & (typ == rq)              # [TB, TE]

    # Induced-subgraph mask: n_mask[edge_index[0]] & n_mask[edge_index[1]].
    keep = mem_src & mem_dst & jnp.logical_not(qmask)

    keep_ref[...] = keep.astype(jnp.int32)
    # Relabeled edge_index / edge_attr; dropped edges padded with -1 (dense
    # padding instead of PyTorch's boolean-mask compaction).
    new_src_ref[...] = jnp.where(keep, idx_src, -1)
    new_dst_ref[...] = jnp.where(keep, idx_dst, -1)
    new_attr_ref[...] = jnp.where(keep, typ, -1)


def nn_subgraphs_forward(e1, e2, r, edge_index, edge_type, node_mask, labels,
                         *, tb=8, te=128):
    """Dense batched subgraph extraction (forward of NNSubgraphs, otf branch).

    e1, e2, r : (B,) int32 query head / tail / relation
    edge_index: (2, E) int32 global graph edges
    edge_type : (E,)  int32 relation per edge
    node_mask : (B, N) int32 0/1 k-hop node subset per query (precomputed glue)
    labels    : (B, N) int32 label per entity

    Returns (keep, new_src, new_dst, new_attr, e1_offset, label_offset) as
    dense padded arrays (dropped edges marked -1, labels 0 outside subset).

    For production sizes use tb=128 (v5e) / 256 (v6e, v7x) and size te so the
    two f32 [N_tile, te] one-hot scratch tiles stay within the per-generation
    VMEM budget (<= ~32 MiB resident on v7x).
    """
    B, N = node_mask.shape
    E = edge_index.shape[1]
    # TODO(synk): pad B to a multiple of tb and E to a multiple of te for
    # arbitrary problem sizes; demo shapes are chosen already aligned.
    assert B % tb == 0 and E % te == 0

    e1 = e1.astype(jnp.int32)
    e2 = e2.astype(jnp.int32)
    r = r.astype(jnp.int32)
    node_mask = node_mask.astype(jnp.int32)
    labels = labels.astype(jnp.int32)

    # Relabel map (cumsum) + packed membership/index value, computed once in
    # plain XLA (removes the N x N triangular matmul from the kernel).
    n_idx = jnp.cumsum(node_mask, axis=1) - 1                    # (B, N)
    packed = (node_mask * (N + 1) + n_idx).astype(jnp.float32)   # (B, N)

    # e1_offset = n_idx[b, e1[b]]  (e1 is always inside its own k-hop subset).
    e1_off = jnp.take_along_axis(n_idx, e1[:, None], axis=1)     # (B, 1)

    # label_offset: labels masked to the subset (dense; 0 outside subset).
    label_off = jnp.where(node_mask > 0, labels, 0)              # (B, N)

    edge_src = edge_index[0].reshape(1, E).astype(jnp.int32)
    edge_dst = edge_index[1].reshape(1, E).astype(jnp.int32)
    edge_typ = edge_type.reshape(1, E).astype(jnp.int32)

    grid = (E // te, B // tb)
    grid_spec = pltpu.PrefetchScalarGridSpec(
        num_scalar_prefetch=0,
        grid=grid,
        in_specs=[
            pl.BlockSpec((tb, 1), lambda e, b: (b, 0)),    # e1
            pl.BlockSpec((tb, 1), lambda e, b: (b, 0)),    # e2
            pl.BlockSpec((tb, 1), lambda e, b: (b, 0)),    # r
            pl.BlockSpec((tb, N), lambda e, b: (b, 0)),    # packed mask/index
            pl.BlockSpec((1, te), lambda e, b: (0, e)),    # edge src tile
            pl.BlockSpec((1, te), lambda e, b: (0, e)),    # edge dst tile
            pl.BlockSpec((1, te), lambda e, b: (0, e)),    # edge type tile
        ],
        out_specs=[
            pl.BlockSpec((tb, te), lambda e, b: (b, e)),   # keep mask
            pl.BlockSpec((tb, te), lambda e, b: (b, e)),   # relabeled src
            pl.BlockSpec((tb, te), lambda e, b: (b, e)),   # relabeled dst
            pl.BlockSpec((tb, te), lambda e, b: (b, e)),   # edge attr
        ],
        scratch_shapes=[
            pltpu.VMEM((N, te), jnp.float32),              # src one-hot
            pltpu.VMEM((N, te), jnp.float32),              # dst one-hot
        ],
    )

    out_shape = (
        jax.ShapeDtypeStruct((B, E), jnp.int32),
        jax.ShapeDtypeStruct((B, E), jnp.int32),
        jax.ShapeDtypeStruct((B, E), jnp.int32),
        jax.ShapeDtypeStruct((B, E), jnp.int32),
    )

    fn = pl.pallas_call(
        _subgraph_edge_kernel,
        grid_spec=grid_spec,
        out_shape=out_shape,
        compiler_params=pltpu.CompilerParams(
            # Edge-tile axis is fully independent -> shard across the two
            # TensorCores on v7x.  The query-batch axis carries the one-hot
            # scratch (built at b == 0), so it stays "arbitrary".
            dimension_semantics=("parallel", "arbitrary"),
            vmem_limit_bytes=32 * 1024 * 1024,
        ),
    )
    keep, new_src, new_dst, new_attr = fn(
        e1[:, None], e2[:, None], r[:, None], packed,
        edge_src, edge_dst, edge_typ)
    return keep, new_src, new_dst, new_attr, e1_off, label_off


def _k_hop_node_mask(e1, e2, r, edge_src, edge_dst, edge_type, num_nodes,
                     hops=3):
    """Glue: dense 3-hop reachability from e1 (flow target_to_source analogue)
    with the query edge removed first, mirroring the PyTorch preprocessing."""
    # TODO(synk): PyTorch's k_hop_subgraph + random max_nodes subsampling is a
    # data-dependent graph traversal; here it is computed densely as glue.
    masks = []
    for b in range(e1.shape[0]):
        q = (edge_src == e1[b]) & (edge_dst == e2[b]) & (edge_type == r[b])
        w = jnp.where(q, 0, 1).astype(jnp.float32)
        A = jnp.zeros((num_nodes, num_nodes), jnp.float32)
        A = A.at[edge_src, edge_dst].add(w)
        reach = jax.nn.one_hot(e1[b], num_nodes, dtype=jnp.float32)[None, :]
        for _ in range(hops):
            reach = jnp.minimum(reach + reach @ A, 1.0)
        masks.append((reach[0] > 0).astype(jnp.int32))
    return jnp.stack(masks, axis=0)


def _reference(e1, e2, r, edge_src, edge_dst, edge_type, node_mask, labels):
    """Pure numpy reference of the dense subgraph extraction semantics."""
    e1, e2, r = map(np.asarray, (e1, e2, r))
    edge_src, edge_dst, edge_type = map(np.asarray,
                                        (edge_src, edge_dst, edge_type))
    node_mask, labels = np.asarray(node_mask), np.asarray(labels)
    B, N = node_mask.shape
    E = edge_src.shape[0]
    keep = np.zeros((B, E), np.int32)
    ns = np.full((B, E), -1, np.int32)
    nd = np.full((B, E), -1, np.int32)
    na = np.full((B, E), -1, np.int32)
    e1o = np.zeros((B, 1), np.int32)
    lab = np.zeros((B, N), np.int32)
    for b in range(B):
        mask = node_mask[b].astype(bool)
        n_idx = np.cumsum(mask.astype(np.int64)) - 1
        q = (edge_src == e1[b]) & (edge_dst == e2[b]) & (edge_type == r[b])
        k = mask[edge_src] & mask[edge_dst] & ~q
        keep[b] = k.astype(np.int32)
        ns[b] = np.where(k, n_idx[edge_src], -1)
        nd[b] = np.where(k, n_idx[edge_dst], -1)
        na[b] = np.where(k, edge_type, -1)
        e1o[b, 0] = n_idx[e1[b]]
        lab[b] = np.where(mask, labels[b], 0)
    return keep, ns, nd, na, e1o, lab


if __name__ == "__main__":
    key = jax.random.PRNGKey(0)
    B, N, E, R = 16, 64, 256, 8   # queries, entities, edges, relations

    k1, k2, k3, k4, k5, k6, k7 = jax.random.split(key, 7)
    edge_src = jax.random.randint(k1, (E,), 0, N, dtype=jnp.int32)
    edge_dst = jax.random.randint(k2, (E,), 0, N, dtype=jnp.int32)
    edge_type = jax.random.randint(k3, (E,), 0, R, dtype=jnp.int32)
    edge_index = jnp.stack([edge_src, edge_dst], axis=0)        # [2, E]

    e1 = jax.random.randint(k4, (B,), 0, N, dtype=jnp.int32)
    e2 = jax.random.randint(k5, (B,), 0, N, dtype=jnp.int32)
    r = jax.random.randint(k6, (B,), 0, R, dtype=jnp.int32)
    labels = jax.random.randint(k7, (B, N), 0, 2, dtype=jnp.int32)

    node_mask = _k_hop_node_mask(e1, e2, r, edge_src, edge_dst, edge_type, N)

    outs = nn_subgraphs_forward(e1, e2, r, edge_index, edge_type,
                                node_mask, labels, tb=8, te=128)
    outs = jax.block_until_ready(outs)
    keep, new_src, new_dst, new_attr, e1_off, lab = outs

    # correctness vs numpy reference
    ref = _reference(e1, e2, r, edge_src, edge_dst, edge_type,
                     node_mask, labels)
    for got, want in zip((keep, new_src, new_dst, new_attr, e1_off, lab), ref):
        np.testing.assert_array_equal(np.asarray(got), want)

    # light sanity checks
    assert keep.shape == (B, E) and e1_off.shape == (B, 1) and lab.shape == (B, N)
    assert bool(jnp.all(e1_off >= 0))          # e1 always in its own subgraph

    # TODO(synk): Batch.from_data_list (variable-length compaction of kept
    # edges / subset nodes into a single batched graph) has no dense Pallas
    # equivalent; outputs here stay dense masks / -1-padded arrays.
    print("KERNEL_OK")
</pallas_src>

<mosaic_0001>
module attributes {stable_mosaic.version = 11 : i64} {
  func.func @_subgraph_edge_kernel(%arg0: i32, %arg1: i32, %arg2: memref<8x1xi32, #tpu.memory_space<vmem>>, %arg3: memref<8x1xi32, #tpu.memory_space<vmem>>, %arg4: memref<8x1xi32, #tpu.memory_space<vmem>>, %arg5: memref<8x64xf32, #tpu.memory_space<vmem>>, %arg6: memref<1x128xi32, #tpu.memory_space<vmem>>, %arg7: memref<1x128xi32, #tpu.memory_space<vmem>>, %arg8: memref<1x128xi32, #tpu.memory_space<vmem>>, %arg9: memref<8x128xi32, #tpu.memory_space<vmem>>, %arg10: memref<8x128xi32, #tpu.memory_space<vmem>>, %arg11: memref<8x128xi32, #tpu.memory_space<vmem>>, %arg12: memref<8x128xi32, #tpu.memory_space<vmem>>, %arg13: memref<64x128xf32, #tpu.memory_space<vmem>>, %arg14: memref<64x128xf32, #tpu.memory_space<vmem>>) attributes {dimension_semantics = [#tpu.dimension_semantics<parallel>, #tpu.dimension_semantics<arbitrary>], iteration_bounds = array<i64: 2, 2>, scalar_prefetch = 0 : i64, scratch_operands = 2 : i64, tpu.core_type = #tpu.core_type<tc>, window_params = [{transform_indices = @transform_0, window_bounds = array<i64: 8, 1>}, {transform_indices = @transform_1, window_bounds = array<i64: 8, 1>}, {transform_indices = @transform_2, window_bounds = array<i64: 8, 1>}, {transform_indices = @transform_3, window_bounds = array<i64: 8, 64>}, {transform_indices = @transform_4, window_bounds = array<i64: 1, 128>}, {transform_indices = @transform_5, window_bounds = array<i64: 1, 128>}, {transform_indices = @transform_6, window_bounds = array<i64: 1, 128>}, {transform_indices = @transform_7, window_bounds = array<i64: 8, 128>}, {transform_indices = @transform_8, window_bounds = array<i64: 8, 128>}, {transform_indices = @transform_9, window_bounds = array<i64: 8, 128>}, {transform_indices = @transform_10, window_bounds = array<i64: 8, 128>}]} {
    %c0 = arith.constant 0 : index
    %c0_0 = arith.constant 0 : index
    %0 = vector.load %arg6[%c0, %c0_0] : memref<1x128xi32, #tpu.memory_space<vmem>>, vector<1x128xi32>
    %c0_1 = arith.constant 0 : index
    %c0_2 = arith.constant 0 : index
    %1 = vector.load %arg7[%c0_1, %c0_2] : memref<1x128xi32, #tpu.memory_space<vmem>>, vector<1x128xi32>
    %c0_3 = arith.constant 0 : index
    %c0_4 = arith.constant 0 : index
    %2 = vector.load %arg8[%c0_3, %c0_4] : memref<1x128xi32, #tpu.memory_space<vmem>>, vector<1x128xi32>
    %c0_i32 = arith.constant 0 : i32
    %3 = arith.cmpi eq, %arg1, %c0_i32 : i32
    %4 = arith.extui %3 : i1 to i32
    %c0_i32_5 = arith.constant 0 : i32
    %5 = arith.cmpi ne, %4, %c0_i32_5 : i32
    scf.if %5 {
      %51 = tpu.iota {dimensions = array<i32: 0>} : vector<64x128xi32>
      %52 = vector.broadcast %0 : vector<1x128xi32> to vector<64x128xi32>
      %53 = arith.cmpi eq, %51, %52 : vector<64x128xi32>
      %54 = arith.extui %53 : vector<64x128xi1> to vector<64x128xi32>
      %55 = arith.sitofp %54 : vector<64x128xi32> to vector<64x128xf32>
      %c0_34 = arith.constant 0 : index
      %c0_35 = arith.constant 0 : index
      %56 = vector.load %arg13[%c0_34, %c0_35] : memref<64x128xf32, #tpu.memory_space<vmem>>, vector<64x128xf32>
      tpu.vector_store %arg13[%c0_34, %c0_35], %55 {strides = array<i32>} : memref<64x128xf32, #tpu.memory_space<vmem>>, vector<64x128xf32>,
      %57 = vector.broadcast %1 : vector<1x128xi32> to vector<64x128xi32>
      %58 = arith.cmpi eq, %51, %57 : vector<64x128xi32>
      %59 = arith.extui %58 : vector<64x128xi1> to vector<64x128xi32>
      %60 = arith.sitofp %59 : vector<64x128xi32> to vector<64x128xf32>
      %c0_36 = arith.constant 0 : index
      %c0_37 = arith.constant 0 : index
      %61 = vector.load %arg14[%c0_36, %c0_37] : memref<64x128xf32, #tpu.memory_space<vmem>>, vector<64x128xf32>
      tpu.vector_store %arg14[%c0_36, %c0_37], %60 {strides = array<i32>} : memref<64x128xf32, #tpu.memory_space<vmem>>, vector<64x128xf32>,
    } else {
    }
    %c0_6 = arith.constant 0 : index
    %c0_7 = arith.constant 0 : index
    %6 = vector.load %arg5[%c0_6, %c0_7] : memref<8x64xf32, #tpu.memory_space<vmem>>, vector<8x64xf32>
    %c0_8 = arith.constant 0 : index
    %c0_9 = arith.constant 0 : index
    %7 = vector.load %arg13[%c0_8, %c0_9] : memref<64x128xf32, #tpu.memory_space<vmem>>, vector<64x128xf32>
    %cst = arith.constant dense<0.000000e+00> : vector<8x128xf32>
    %8 = tpu.matmul %6, %7, %cst {dimension_numbers = #tpu.dot_dimension_numbers<[1], [0], [0], [1], [0, 0, 1, 1], [], []>} : vector<8x64xf32>, vector<64x128xf32>, vector<8x128xf32> -> vector<8x128xf32>
    %c0_10 = arith.constant 0 : index
    %c0_11 = arith.constant 0 : index
    %9 = vector.load %arg14[%c0_10, %c0_11] : memref<64x128xf32, #tpu.memory_space<vmem>>, vector<64x128xf32>
    %cst_12 = arith.constant dense<0.000000e+00> : vector<8x128xf32>
    %10 = tpu.matmul %6, %9, %cst_12 {dimension_numbers = #tpu.dot_dimension_numbers<[1], [0], [0], [1], [0, 0, 1, 1], [], []>} : vector<8x64xf32>, vector<64x128xf32>, vector<8x128xf32> -> vector<8x128xf32>
    %cst_13 = arith.constant 6.400000e+01 : f32
    %11 = vector.broadcast %cst_13 : f32 to vector<8x128xf32>
    %12 = arith.cmpf oge, %8, %11 : vector<8x128xf32>
    %cst_14 = arith.constant 6.400000e+01 : f32
    %13 = vector.broadcast %cst_14 : f32 to vector<8x128xf32>
    %14 = arith.cmpf oge, %10, %13 : vector<8x128xf32>
    %cst_15 = arith.constant 6.500000e+01 : f32
    %15 = vector.broadcast %cst_15 : f32 to vector<8x128xf32>
    %16 = arith.subf %8, %15 : vector<8x128xf32>
    %17 = arith.fptosi %16 : vector<8x128xf32> to vector<8x128xi32>
    %cst_16 = arith.constant 6.500000e+01 : f32
    %18 = vector.broadcast %cst_16 : f32 to vector<8x128xf32>
    %19 = arith.subf %10, %18 : vector<8x128xf32>
    %20 = arith.fptosi %19 : vector<8x128xf32> to vector<8x128xi32>
    %c0_17 = arith.constant 0 : index
    %c0_18 = arith.constant 0 : index
    %21 = vector.load %arg2[%c0_17, %c0_18] : memref<8x1xi32, #tpu.memory_space<vmem>>, vector<8x1xi32>
    %c0_19 = arith.constant 0 : index
    %c0_20 = arith.constant 0 : index
    %22 = vector.load %arg3[%c0_19, %c0_20] : memref<8x1xi32, #tpu.memory_space<vmem>>, vector<8x1xi32>
    %c0_21 = arith.constant 0 : index
    %c0_22 = arith.constant 0 : index
    %23 = vector.load %arg4[%c0_21, %c0_22] : memref<8x1xi32, #tpu.memory_space<vmem>>, vector<8x1xi32>
    %24 = vector.broadcast %0 : vector<1x128xi32> to vector<8x128xi32>
    %25 = vector.broadcast %21 : vector<8x1xi32> to vector<8x128xi32>
    %26 = arith.cmpi eq, %24, %25 : vector<8x128xi32>
    %27 = vector.broadcast %1 : vector<1x128xi32> to vector<8x128xi32>
    %28 = vector.broadcast %22 : vector<8x1xi32> to vector<8x128xi32>
    %29 = arith.cmpi eq, %27, %28 : vector<8x128xi32>
    %30 = arith.andi %26, %29 : vector<8x128xi1>
    %31 = vector.broadcast %2 : vector<1x128xi32> to vector<8x128xi32>
    %32 = vector.broadcast %23 : vector<8x1xi32> to vector<8x128xi32>
    %33 = arith.cmpi eq, %31, %32 : vector<8x128xi32>
    %34 = arith.andi %30, %33 : vector<8x128xi1>
    %35 = arith.andi %12, %14 : vector<8x128xi1>
    %cst_23 = arith.constant dense<true> : vector<8x128xi1>
    %36 = arith.xori %34, %cst_23 : vector<8x128xi1>
    %37 = arith.andi %35, %36 : vector<8x128xi1>
    %38 = arith.extui %37 : vector<8x128xi1> to vector<8x128xi32>
    %c0_24 = arith.constant 0 : index
    %c0_25 = arith.constant 0 : index
    %39 = vector.load %arg9[%c0_24, %c0_25] : memref<8x128xi32, #tpu.memory_space<vmem>>, vector<8x128xi32>
    tpu.vector_store %arg9[%c0_24, %c0_25], %38 {strides = array<i32>} : memref<8x128xi32, #tpu.memory_space<vmem>>, vector<8x128xi32>,
    %c-1_i32 = arith.constant -1 : i32
    %40 = vector.broadcast %c-1_i32 : i32 to vector<8x128xi32>
    %41 = arith.select %37, %17, %40 : vector<8x128xi1>, vector<8x128xi32>
    %c0_26 = arith.constant 0 : index
    %c0_27 = arith.constant 0 : index
    %42 = vector.load %arg10[%c0_26, %c0_27] : memref<8x128xi32, #tpu.memory_space<vmem>>, vector<8x128xi32>
    tpu.vector_store %arg10[%c0_26, %c0_27], %41 {strides = array<i32>} : memref<8x128xi32, #tpu.memory_space<vmem>>, vector<8x128xi32>,
    %c-1_i32_28 = arith.constant -1 : i32
    %43 = vector.broadcast %c-1_i32_28 : i32 to vector<8x128xi32>
    %44 = arith.select %37, %20, %43 : vector<8x128xi1>, vector<8x128xi32>
    %c0_29 = arith.constant 0 : index
    %c0_30 = arith.constant 0 : index
    %45 = vector.load %arg11[%c0_29, %c0_30] : memref<8x128xi32, #tpu.memory_space<vmem>>, vector<8x128xi32>
    tpu.vector_store %arg11[%c0_29, %c0_30], %44 {strides = array<i32>} : memref<8x128xi32, #tpu.memory_space<vmem>>, vector<8x128xi32>,
    %c-1_i32_31 = arith.constant -1 : i32
    %46 = vector.shape_cast %2 : vector<1x128xi32> to vector<1x128xi32>
    %47 = vector.broadcast %46 : vector<1x128xi32> to vector<8x128xi32>
    %48 = vector.broadcast %c-1_i32_31 : i32 to vector<8x128xi32>
    %49 = arith.select %37, %47, %48 : vector<8x128xi1>, vector<8x128xi32>
    %c0_32 = arith.constant 0 : index
    %c0_33 = arith.constant 0 : index
    %50 = vector.load %arg12[%c0_32, %c0_33] : memref<8x128xi32, #tpu.memory_space<vmem>>, vector<8x128xi32>
    tpu.vector_store %arg12[%c0_32, %c0_33], %49 {strides = array<i32>} : memref<8x128xi32, #tpu.memory_space<vmem>>, vector<8x128xi32>,
    return
  }
  func.func @transform_0(%arg0: i32, %arg1: i32) -> (i32, i32) {
    %c0_i32 = arith.constant 0 : i32
    %c0_i32_0 = arith.constant 0 : i32
    return %arg1, %c0_i32 : i32, i32
  }
  func.func @transform_1(%arg0: i32, %arg1: i32) -> (i32, i32) {
    %c0_i32 = arith.constant 0 : i32
    %c0_i32_0 = arith.constant 0 : i32
    return %arg1, %c0_i32 : i32, i32
  }
  func.func @transform_2(%arg0: i32, %arg1: i32) -> (i32, i32) {
    %c0_i32 = arith.constant 0 : i32
    %c0_i32_0 = arith.constant 0 : i32
    return %arg1, %c0_i32 : i32, i32
  }
  func.func @transform_3(%arg0: i32, %arg1: i32) -> (i32, i32) {
    %c0_i32 = arith.constant 0 : i32
    %c0_i32_0 = arith.constant 0 : i32
    return %arg1, %c0_i32 : i32, i32
  }
  func.func @transform_4(%arg0: i32, %arg1: i32) -> (i32, i32) {
    %c0_i32 = arith.constant 0 : i32
    %c0_i32_0 = arith.constant 0 : i32
    return %c0_i32, %arg0 : i32, i32
  }
  func.func @transform_5(%arg0: i32, %arg1: i32) -> (i32, i32) {
    %c0_i32 = arith.constant 0 : i32
    %c0_i32_0 = arith.constant 0 : i32
    return %c0_i32, %arg0 : i32, i32
  }
  func.func @transform_6(%arg0: i32, %arg1: i32) -> (i32, i32) {
    %c0_i32 = arith.constant 0 : i32
    %c0_i32_0 = arith.constant 0 : i32
    return %c0_i32, %arg0 : i32, i32
  }
  func.func @transform_7(%arg0: i32, %arg1: i32) -> (i32, i32) {
    %c0_i32 = arith.constant 0 : i32
    return %arg1, %arg0 : i32, i32
  }
  func.func @transform_8(%arg0: i32, %arg1: i32) -> (i32, i32) {
    %c0_i32 = arith.constant 0 : i32
    return %arg1, %arg0 : i32, i32
  }
  func.func @transform_9(%arg0: i32, %arg1: i32) -> (i32, i32) {
    %c0_i32 = arith.constant 0 : i32
    return %arg1, %arg0 : i32, i32
  }
  func.func @transform_10(%arg0: i32, %arg1: i32) -> (i32, i32) {
    %c0_i32 = arith.constant 0 : i32
    return %arg1, %arg0 : i32, i32
  }
}

</mosaic_0001>

<llo_original>
// kernel: tpu_custom_call.1
$region0: #{tpu_custom_call.1}
  #allocation0 [shape = 'u32[]', space=smem, size = 0x4, offset = 0x4, fixed_abs, tag = 'smem constant byte address 0x4 - core index']
  #allocation1 [shape = 'u32[144,128]{1,0:T(1,128)}', space=vmem, size = 0x12000, scoped, tag = 'internal scratch']
  #allocation2 [shape = 'f32[64,128]{1,0:T(8,128)}', space=vmem, size = 0x8000, scoped, tag = 'scratch operand']
  #allocation3 [shape = 'f32[64,128]{1,0:T(8,128)}', space=vmem, size = 0x8000, scoped, tag = 'scratch operand']
  %s0 = inlined_call_operand.vmem [shape: s32[16,1], index: 0, kind: input, shape index: {}]
  %s1 = inlined_call_operand.vmem [shape: s32[16,1], index: 1, kind: input, shape index: {}]
  %s2 = inlined_call_operand.vmem [shape: s32[16,1], index: 2, kind: input, shape index: {}]
  %s3 = inlined_call_operand.vmem [shape: f32[16,64], index: 3, kind: input, shape index: {}]
  %s4 = inlined_call_operand.vmem [shape: s32[1,256], index: 4, kind: input, shape index: {}]
  %s5 = inlined_call_operand.vmem [shape: s32[1,256], index: 5, kind: input, shape index: {}]
  %s6 = inlined_call_operand.vmem [shape: s32[1,256], index: 6, kind: input, shape index: {}]
  %s7 = inlined_call_operand.hbm [shape: s32[16,256], index: 7, kind: output, shape index: {0}]
  %s8 = inlined_call_operand.hbm [shape: s32[16,256], index: 8, kind: output, shape index: {1}]
  %s9 = inlined_call_operand.hbm [shape: s32[16,256], index: 9, kind: output, shape index: {2}]
  %s10 = inlined_call_operand.hbm [shape: s32[16,256], index: 10, kind: output, shape index: {3}]
  %11 = xla_tuple %s7, %s8, %s9, %s10
  %s12 = sld [smem:[#allocation0]]
  $region89: #{tpu_custom_call.1} parent=0
    _
  %s14 = ssub.s32 1, %s12
  %s15 = scalar_select 0, %s14, %s12
  $region1: #{tpu_custom_call.1} parent=0
    #allocation4 [shape = 'u8[8192]{0}', space=vmem, size = 0x2000, scoped, tag = 'output window, operand 0']
    #allocation5 [shape = 's32[2]{0}', space=sflag, size = 0x8, scoped, tag = 'scoped memory for tpu_custom_call.1']
    #allocation6 [shape = 'u8[8192]{0}', space=vmem, size = 0x2000, scoped, tag = 'output window, operand 1']
    #allocation7 [shape = 's32[2]{0}', space=sflag, size = 0x8, scoped, tag = 'scoped memory for tpu_custom_call.1']
    #allocation8 [shape = 'u8[8192]{0}', space=vmem, size = 0x2000, scoped, tag = 'output window, operand 2']
    #allocation9 [shape = 'u8[8192]{0}', space=vmem, size = 0x2000, scoped, tag = 'output window, operand 3']
    #allocation10 [shape = 's32[2]{0}', space=sflag, size = 0x8, scoped, tag = 'scoped memory for tpu_custom_call.1']
    %16 = vsyncpa [#allocation5], 0
    %s17 = scalar_lea.sflag [#allocation5], 1
    %18 = vsyncpa %s17, 0
    %19 = vsyncpa [#allocation7], 0
    %s20 = scalar_lea.sflag [#allocation7], 1
    %21 = vsyncpa %s20, 0
    %22 = vsyncpa [#allocation10], 0
    %s23 = scalar_lea.sflag [#allocation10], 1
    %24 = vsyncpa %s23, 0
    loop: start=0, step=1, limit=6
    $region2: #{tpu_custom_call.1} parent=1 // loop_pre_header
      _
    $region3: #{tpu_custom_call.1} parent=1 // loop_header
      %s26 = sphi 0, %s30
      %p27 = scmp.ge.s32.totalorder %s26, 6
      %s33 = sphi 0, %s45
      %s34 = sphi 0, %s41
      %s35 = sphi 0, %s33
      %s36 = sphi 0, %s34
      %s37 = sphi 0, %s35
      %s38 = sphi 0, %s36
      %s48 = sphi 0, %s50
      %s51 = sphi 0, %s48
      %s52 = sphi 0, %s51
      %s68 = sphi 0, %s52
      %s74 = sphi 0, %s76
      %s77 = sphi 0, %s74
      %s78 = sphi 0, %s77
      %s94 = sphi 0, %s78
      %s100 = sphi 0, %s102
      %s103 = sphi 0, %s100
      %s104 = sphi 0, %s103
      %s120 = sphi 0, %s104
      %s126 = sphi 0, %s128
      %s129 = sphi 0, %s126
      %s130 = sphi 0, %s129
      %s146 = sphi 0, %s130
      %s152 = sphi 0, %s154
      %s155 = sphi 0, %s152
      %s156 = sphi 0, %s155
      %s172 = sphi 0, %s156
      %s178 = sphi 0, %s180
      %s181 = sphi 0, %s178
      %s182 = sphi 0, %s181
      %s198 = sphi 0, %s182
      %s204 = sphi 0, %s206
      %s207 = sphi 0, %s204
      %s208 = sphi 0, %s207
      %s224 = sphi 0, %s208
      %s232 = sphi 0, %s234
      %s235 = sphi 0, %s232
      %s236 = sphi 0, %s235
      %s252 = sphi 0, %s236
      %s260 = sphi 0, %s262
      %s263 = sphi 0, %s260
      %s264 = sphi 0, %s263
      %s280 = sphi 0, %s264
      %s288 = sphi 0, %s290
      %s291 = sphi 0, %s288
      %s292 = sphi 0, %s291
      %s308 = sphi 0, %s292
      %s316 = sphi 0, %s318
      %s319 = sphi 0, %s316
      %s320 = sphi 0, %s319
      %s336 = sphi 0, %s320
    $region4: #{tpu_custom_call.1} parent=1 // loop_header_branch
      %29 = sbr.rel (%p27) target = $region8
    $region5: #{tpu_custom_call.1} parent=1 // loop_body
      %s31 = ssub.s32 %s26, 1
      %s32 = ssub.s32 %s26, 2
      %s39 = sadd.s32 1, %s34
      %p40 = scmp.ge.s32.totalorder %s39, 2
      %s41 = scalar_select %p40, 0, %s39
      %s42 = sadd.s32 1, %s33
      %s43 = scalar_select %p40, %s42, %s33
      %p44 = scmp.ge.s32.totalorder %s43, 2
      %s45 = scalar_select %p44, 0, %s43
      %s46 = ssub.s32 %s34, %s41
      %p47 = scmp.eq.s32.totalorder %s46, 0
      %s49 = sadd.s32 %s48, 1
      %s50 = scalar_select %p47, %s48, %s49
      %p53 = pneg %p47
      %p54 = scmp.eq.s32.totalorder %s26, 3
      %p55 = por %p53, %p54
      %p56 = scmp.ne.s32.totalorder %s48, %s51
      %p57 = scmp.eq.s32.totalorder %s26, 0
      %p58 = por %p56, %p57
      %p59 = scmp.ne.s32.totalorder %s48, %s51
      %p60 = scmp.eq.s32.totalorder %s31, 3
      %p61 = por %p59, %p60
      %p62 = scmp.ne.s32.totalorder %s51, %s52
      %p63 = scmp.eq.s32.totalorder %s31, 0
      %p64 = por %p62, %p63
      %p65 = scmp.ne.s32.totalorder %s51, %s52
      %p66 = scmp.eq.s32.totalorder %s32, 3
      %p67 = por %p65, %p66
      %p69 = scmp.ne.s32.totalorder %s52, %s68
      %p70 = scmp.eq.s32.totalorder %s32, 0
      %p71 = por %p69, %p70
      %s72 = ssub.s32 %s34, %s41
      %p73 = scmp.eq.s32.totalorder %s72, 0
      %s75 = sadd.s32 %s74, 1
      %s76 = scalar_select %p73, %s74, %s75
      %p79 = pneg %p73
      %p80 = scmp.eq.s32.totalorder %s26, 3
      %p81 = por %p79, %p80
      %p82 = scmp.ne.s32.totalorder %s74, %s77
      %p83 = scmp.eq.s32.totalorder %s26, 0
      %p84 = por %p82, %p83
      %p85 = scmp.ne.s32.totalorder %s74, %s77
      %p86 = scmp.eq.s32.totalorder %s31, 3
      %p87 = por %p85, %p86
      %p88 = scmp.ne.s32.totalorder %s77, %s78
      %p89 = scmp.eq.s32.totalorder %s31, 0
      %p90 = por %p88, %p89
      %p91 = scmp.ne.s32.totalorder %s77, %s78
      %p92 = scmp.eq.s32.totalorder %s32, 3
      %p93 = por %p91, %p92
      %p95 = scmp.ne.s32.totalorder %s78, %s94
      %p96 = scmp.eq.s32.totalorder %s32, 0
      %p97 = por %p95, %p96
      %s98 = ssub.s32 %s34, %s41
      %p99 = scmp.eq.s32.totalorder %s98, 0
      %s101 = sadd.s32 %s100, 1
      %s102 = scalar_select %p99, %s100, %s101
      %p105 = pneg %p99
      %p106 = scmp.eq.s32.totalorder %s26, 3
      %p107 = por %p105, %p106
      %p108 = scmp.ne.s32.totalorder %s100, %s103
      %p109 = scmp.eq.s32.totalorder %s26, 0
      %p110 = por %p108, %p109
      %p111 = scmp.ne.s32.totalorder %s100, %s103
      %p112 = scmp.eq.s32.totalorder %s31, 3
      %p113 = por %p111, %p112
      %p114 = scmp.ne.s32.totalorder %s103, %s104
      %p115 = scmp.eq.s32.totalorder %s31, 0
      %p116 = por %p114, %p115
      %p117 = scmp.ne.s32.totalorder %s103, %s104
      %p118 = scmp.eq.s32.totalorder %s32, 3
      %p119 = por %p117, %p118
      %p121 = scmp.ne.s32.totalorder %s104, %s120
      %p122 = scmp.eq.s32.totalorder %s32, 0
      %p123 = por %p121, %p122
      %s124 = ssub.s32 %s34, %s41
      %p125 = scmp.eq.s32.totalorder %s124, 0
      %s127 = sadd.s32 %s126, 1
      %s128 = scalar_select %p125, %s126, %s127
      %p131 = pneg %p125
      %p132 = scmp.eq.s32.totalorder %s26, 3
      %p133 = por %p131, %p132
      %p134 = scmp.ne.s32.totalorder %s126, %s129
      %p135 = scmp.eq.s32.totalorder %s26, 0
      %p136 = por %p134, %p135
      %p137 = scmp.ne.s32.totalorder %s126, %s129
      %p138 = scmp.eq.s32.totalorder %s31, 3
      %p139 = por %p137, %p138
      %p140 = scmp.ne.s32.totalorder %s129, %s130
      %p141 = scmp.eq.s32.totalorder %s31, 0
      %p142 = por %p140, %p141
      %p143 = scmp.ne.s32.totalorder %s129, %s130
      %p144 = scmp.eq.s32.totalorder %s32, 3
      %p145 = por %p143, %p144
      %p147 = scmp.ne.s32.totalorder %s130, %s146
      %p148 = scmp.eq.s32.totalorder %s32, 0
      %p149 = por %p147, %p148
      %s150 = ssub.s32 %s33, %s45
      %p151 = scmp.eq.s32.totalorder %s150, 0
      %s153 = sadd.s32 %s152, 1
      %s154 = scalar_select %p151, %s152, %s153
      %p157 = pneg %p151
      %p158 = scmp.eq.s32.totalorder %s26, 3
      %p159 = por %p157, %p158
      %p160 = scmp.ne.s32.totalorder %s152, %s155
      %p161 = scmp.eq.s32.totalorder %s26, 0
      %p162 = por %p160, %p161
      %p163 = scmp.ne.s32.totalorder %s152, %s155
      %p164 = scmp.eq.s32.totalorder %s31, 3
      %p165 = por %p163, %p164
      %p166 = scmp.ne.s32.totalorder %s155, %s156
      %p167 = scmp.eq.s32.totalorder %s31, 0
      %p168 = por %p166, %p167
      %p169 = scmp.ne.s32.totalorder %s155, %s156
      %p170 = scmp.eq.s32.totalorder %s32, 3
      %p171 = por %p169, %p170
      %p173 = scmp.ne.s32.totalorder %s156, %s172
      %p174 = scmp.eq.s32.totalorder %s32, 0
      %p175 = por %p173, %p174
      %s176 = ssub.s32 %s33, %s45
      %p177 = scmp.eq.s32.totalorder %s176, 0
      %s179 = sadd.s32 %s178, 1
      %s180 = scalar_select %p177, %s178, %s179
      %p183 = pneg %p177
      %p184 = scmp.eq.s32.totalorder %s26, 3
      %p185 = por %p183, %p184
      %p186 = scmp.ne.s32.totalorder %s178, %s181
      %p187 = scmp.eq.s32.totalorder %s26, 0
      %p188 = por %p186, %p187
      %p189 = scmp.ne.s32.totalorder %s178, %s181
      %p190 = scmp.eq.s32.totalorder %s31, 3
      %p191 = por %p189, %p190
      %p192 = scmp.ne.s32.totalorder %s181, %s182
      %p193 = scmp.eq.s32.totalorder %s31, 0
      %p194 = por %p192, %p193
      %p195 = scmp.ne.s32.totalorder %s181, %s182
      %p196 = scmp.eq.s32.totalorder %s32, 3
      %p197 = por %p195, %p196
      %p199 = scmp.ne.s32.totalorder %s182, %s198
      %p200 = scmp.eq.s32.totalorder %s32, 0
      %p201 = por %p199, %p200
      %s202 = ssub.s32 %s33, %s45
      %p203 = scmp.eq.s32.totalorder %s202, 0
      %s205 = sadd.s32 %s204, 1
      %s206 = scalar_select %p203, %s204, %s205
      %p209 = pneg %p203
      %p210 = scmp.eq.s32.totalorder %s26, 3
      %p211 = por %p209, %p210
      %p212 = scmp.ne.s32.totalorder %s204, %s207
      %p213 = scmp.eq.s32.totalorder %s26, 0
      %p214 = por %p212, %p213
      %p215 = scmp.ne.s32.totalorder %s204, %s207
      %p216 = scmp.eq.s32.totalorder %s31, 3
      %p217 = por %p215, %p216
      %p218 = scmp.ne.s32.totalorder %s207, %s208
      %p219 = scmp.eq.s32.totalorder %s31, 0
      %p220 = por %p218, %p219
      %p221 = scmp.ne.s32.totalorder %s207, %s208
      %p222 = scmp.eq.s32.totalorder %s32, 3
      %p223 = por %p221, %p222
      %p225 = scmp.ne.s32.totalorder %s208, %s224
      %p226 = scmp.eq.s32.totalorder %s32, 0
      %p227 = por %p225, %p226
      %s228 = ssub.s32 %s34, %s41
      %s229 = ssub.s32 %s33, %s45
      %s230 = sor.u32 %s228, %s229
      %p231 = scmp.eq.s32.totalorder %s230, 0
      %s233 = sadd.s32 %s232, 1
      %s234 = scalar_select %p231, %s232, %s233
      %p237 = pneg %p231
      %p238 = scmp.eq.s32.totalorder %s26, 3
      %p239 = por %p237, %p238
      %p240 = scmp.ne.s32.totalorder %s232, %s235
      %p241 = scmp.eq.s32.totalorder %s26, 0
      %p242 = por %p240, %p241
      %p243 = scmp.ne.s32.totalorder %s232, %s235
      %p244 = scmp.eq.s32.totalorder %s31, 3
      %p245 = por %p243, %p244
      %p246 = scmp.ne.s32.totalorder %s235, %s236
      %p247 = scmp.eq.s32.totalorder %s31, 0
      %p248 = por %p246, %p247
      %p249 = scmp.ne.s32.totalorder %s235, %s236
      %p250 = scmp.eq.s32.totalorder %s32, 3
      %p251 = por %p249, %p250
      %p253 = scmp.ne.s32.totalorder %s236, %s252
      %p254 = scmp.eq.s32.totalorder %s32, 0
      %p255 = por %p253, %p254
      %s256 = ssub.s32 %s34, %s41
      %s257 = ssub.s32 %s33, %s45
      %s258 = sor.u32 %s256, %s257
      %p259 = scmp.eq.s32.totalorder %s258, 0
      %s261 = sadd.s32 %s260, 1
      %s262 = scalar_select %p259, %s260, %s261
      %p265 = pneg %p259
      %p266 = scmp.eq.s32.totalorder %s26, 3
      %p267 = por %p265, %p266
      %p268 = scmp.ne.s32.totalorder %s260, %s263
      %p269 = scmp.eq.s32.totalorder %s26, 0
      %p270 = por %p268, %p269
      %p271 = scmp.ne.s32.totalorder %s260, %s263
      %p272 = scmp.eq.s32.totalorder %s31, 3
      %p273 = por %p271, %p272
      %p274 = scmp.ne.s32.totalorder %s263, %s264
      %p275 = scmp.eq.s32.totalorder %s31, 0
      %p276 = por %p274, %p275
      %p277 = scmp.ne.s32.totalorder %s263, %s264
      %p278 = scmp.eq.s32.totalorder %s32, 3
      %p279 = por %p277, %p278
      %p281 = scmp.ne.s32.totalorder %s264, %s280
      %p282 = scmp.eq.s32.totalorder %s32, 0
      %p283 = por %p281, %p282
      %s284 = ssub.s32 %s34, %s41
      %s285 = ssub.s32 %s33, %s45
      %s286 = sor.u32 %s284, %s285
      %p287 = scmp.eq.s32.totalorder %s286, 0
      %s289 = sadd.s32 %s288, 1
      %s290 = scalar_select %p287, %s288, %s289
      %p293 = pneg %p287
      %p294 = scmp.eq.s32.totalorder %s26, 3
      %p295 = por %p293, %p294
      %p296 = scmp.ne.s32.totalorder %s288, %s291
      %p297 = scmp.eq.s32.totalorder %s26, 0
      %p298 = por %p296, %p297
      %p299 = scmp.ne.s32.totalorder %s288, %s291
      %p300 = scmp.eq.s32.totalorder %s31, 3
      %p301 = por %p299, %p300
      %p302 = scmp.ne.s32.totalorder %s291, %s292
      %p303 = scmp.eq.s32.totalorder %s31, 0
      %p304 = por %p302, %p303
      %p305 = scmp.ne.s32.totalorder %s291, %s292
      %p306 = scmp.eq.s32.totalorder %s32, 3
      %p307 = por %p305, %p306
      %p309 = scmp.ne.s32.totalorder %s292, %s308
      %p310 = scmp.eq.s32.totalorder %s32, 0
      %p311 = por %p309, %p310
      %s312 = ssub.s32 %s34, %s41
      %s313 = ssub.s32 %s33, %s45
      %s314 = sor.u32 %s312, %s313
      %p315 = scmp.eq.s32.totalorder %s314, 0
      %s317 = sadd.s32 %s316, 1
      %s318 = scalar_select %p315, %s316, %s317
      %p321 = pneg %p315
      %p322 = scmp.eq.s32.totalorder %s26, 3
      %p323 = por %p321, %p322
      %p324 = scmp.ne.s32.totalorder %s316, %s319
      %p325 = scmp.eq.s32.totalorder %s26, 0
      %p326 = por %p324, %p325
      %p327 = scmp.ne.s32.totalorder %s316, %s319
      %p328 = scmp.eq.s32.totalorder %s31, 3
      %p329 = por %p327, %p328
      %p330 = scmp.ne.s32.totalorder %s319, %s320
      %p331 = scmp.eq.s32.totalorder %s31, 0
      %p332 = por %p330, %p331
      %p333 = scmp.ne.s32.totalorder %s319, %s320
      %p334 = scmp.eq.s32.totalorder %s32, 3
      %p335 = por %p333, %p334
      %p337 = scmp.ne.s32.totalorder %s320, %s336
      %p338 = scmp.eq.s32.totalorder %s32, 0
      %p339 = por %p337, %p338
      %p340 = scmp.le.s32.totalorder 1, %s26
      %p341 = scmp.lt.s32.totalorder %s26, 5
      %p342 = pnand %p340, %p341
      %p343 = pneg %p342
      // Predicated region
      $region9: #{tpu_custom_call.1} parent=5 // pred_check
        _
      $region10: #{tpu_custom_call.1} parent=5 // pred_check_branch
        %345 = sbr.rel (%p342) target = $region12
      $region11: #{tpu_custom_call.1} parent=5 // pred_region
        %s346 = ssub.s32 %s26, 1
      $region12: #{tpu_custom_call.1} parent=5 // pred_fallthru
        _
      %p347 = scmp.lt.s32.totalorder %s26, 4
      // Predicated region
      $region13: #{tpu_custom_call.1} parent=5 // pred_check
        %p348 = pneg %p347
      $region14: #{tpu_custom_call.1} parent=5 // pred_check_branch
        %350 = sbr.rel (%p348) target = $region16
      $region15: #{tpu_custom_call.1} parent=5 // pred_region
        // Predicated region
        $region17: #{tpu_custom_call.1} parent=15 // pred_check
          %p351 = pneg %p58
        $region18: #{tpu_custom_call.1} parent=15 // pred_check_branch
          %353 = sbr.rel (%p351) target = $region20
        $region19: #{tpu_custom_call.1} parent=15 // pred_region
          %p354 = scmp.lt.s32.totalorder %s34, 1
          %s355 = scalar_select %p354, %s34, 1
          %s356 = smul.addr %s355, 8
          %s357 = scalar_lea.vmem %s0, %s356
        $region20: #{tpu_custom_call.1} parent=15 // pred_fallthru
          _
        // Predicated region
        $region21: #{tpu_custom_call.1} parent=15 // pred_check
          %p358 = pneg %p84
        $region22: #{tpu_custom_call.1} parent=15 // pred_check_branch
          %360 = sbr.rel (%p358) target = $region24
        $region23: #{tpu_custom_call.1} parent=15 // pred_region
          %p361 = scmp.lt.s32.totalorder %s34, 1
          %s362 = scalar_select %p361, %s34, 1
          %s363 = smul.addr %s362, 8
          %s364 = scalar_lea.vmem %s1, %s363
        $region24: #{tpu_custom_call.1} parent=15 // pred_fallthru
          _
        // Predicated region
        $region25: #{tpu_custom_call.1} parent=15 // pred_check
          %p365 = pneg %p110
        $region26: #{tpu_custom_call.1} parent=15 // pred_check_branch
          %367 = sbr.rel (%p365) target = $region28
        $region27: #{tpu_custom_call.1} parent=15 // pred_region
          %p368 = scmp.lt.s32.totalorder %s34, 1
          %s369 = scalar_select %p368, %s34, 1
          %s370 = smul.addr %s369, 8
          %s371 = scalar_lea.vmem %s2, %s370
        $region28: #{tpu_custom_call.1} parent=15 // pred_fallthru
          _
        // Predicated region
        $region29: #{tpu_custom_call.1} parent=15 // pred_check
          %p372 = pneg %p136
        $region30: #{tpu_custom_call.1} parent=15 // pred_check_branch
          %374 = sbr.rel (%p372) target = $region32
        $region31: #{tpu_custom_call.1} parent=15 // pred_region
          %p375 = scmp.lt.s32.totalorder %s34, 1
          %s376 = scalar_select %p375, %s34, 1
          %s377 = smul.addr %s376, 8
          %s378 = scalar_lea.vmem %s3, %s377
        $region32: #{tpu_custom_call.1} parent=15 // pred_fallthru
          _
        // Predicated region
        $region33: #{tpu_custom_call.1} parent=15 // pred_check
          %p379 = pneg %p162
        $region34: #{tpu_custom_call.1} parent=15 // pred_check_branch
          %381 = sbr.rel (%p379) target = $region36
        $region35: #{tpu_custom_call.1} parent=15 // pred_region
          %p382 = scmp.lt.s32.totalorder %s33, 1
          %s383 = scalar_select %p382, %s33, 1
          %s384 = scalar_lea.vmem %s4, %s383
        $region36: #{tpu_custom_call.1} parent=15 // pred_fallthru
          _
        // Predicated region
        $region37: #{tpu_custom_call.1} parent=15 // pred_check
          %p385 = pneg %p188
        $region38: #{tpu_custom_call.1} parent=15 // pred_check_branch
          %387 = sbr.rel (%p385) target = $region40
        $region39: #{tpu_custom_call.1} parent=15 // pred_region
          %p388 = scmp.lt.s32.totalorder %s33, 1
          %s389 = scalar_select %p388, %s33, 1
          %s390 = scalar_lea.vmem %s5, %s389
        $region40: #{tpu_custom_call.1} parent=15 // pred_fallthru
          _
        // Predicated region
        $region41: #{tpu_custom_call.1} parent=15 // pred_check
          %p391 = pneg %p214
        $region42: #{tpu_custom_call.1} parent=15 // pred_check_branch
          %393 = sbr.rel (%p391) target = $region44
        $region43: #{tpu_custom_call.1} parent=15 // pred_region
          %p394 = scmp.lt.s32.totalorder %s33, 1
          %s395 = scalar_select %p394, %s33, 1
          %s396 = scalar_lea.vmem %s6, %s395
        $region44: #{tpu_custom_call.1} parent=15 // pred_fallthru
          _
      $region16: #{tpu_custom_call.1} parent=5 // pred_fallthru
        _
      %p397 = scmp.le.s32.totalorder 1, %s26
      %p398 = scmp.lt.s32.totalorder %s26, 5
      %p399 = pnand %p397, %p398
      %p400 = pneg %p399
      // Predicated region
      $region45: #{tpu_custom_call.1} parent=5 // pred_check
        _
      $region46: #{tpu_custom_call.1} parent=5 // pred_check_branch
        %402 = sbr.rel (%p399) target = $region48
      $region47: #{tpu_custom_call.1} parent=5 // pred_region
        %s403 = ssub.s32 %s26, 1
        %p404 = scmp.lt.s32.totalorder %s36, 1
        %s405 = scalar_select %p404, %s36, 1
        %s406 = smul.addr %s405, 8
        %s407 = scalar_lea.vmem %s0, %s406
        %p408 = pneg %p64
        %p409 = pneg %p61
        %p410 = scmp.lt.s32.totalorder %s36, 1
        %s411 = scalar_select %p410, %s36, 1
        %s412 = smul.addr %s411, 8
        %s413 = scalar_lea.vmem %s1, %s412
        %p414 = pneg %p90
        %p415 = pneg %p87
        %p416 = scmp.lt.s32.totalorder %s36, 1
        %s417 = scalar_select %p416, %s36, 1
        %s418 = smul.addr %s417, 8
        %s419 = scalar_lea.vmem %s2, %s418
        %p420 = pneg %p116
        %p421 = pneg %p113
        %p422 = scmp.lt.s32.totalorder %s36, 1
        %s423 = scalar_select %p422, %s36, 1
        %s424 = smul.addr %s423, 8
        %s425 = scalar_lea.vmem %s3, %s424
        %p426 = pneg %p142
        %p427 = pneg %p139
        %p428 = scmp.lt.s32.totalorder %s35, 1
        %s429 = scalar_select %p428, %s35, 1
        %s430 = scalar_lea.vmem %s4, %s429
        %p431 = pneg %p168
        %p432 = pneg %p165
        %p433 = scmp.lt.s32.totalorder %s35, 1
        %s434 = scalar_select %p433, %s35, 1
        %s435 = scalar_lea.vmem %s5, %s434
        %p436 = pneg %p194
        %p437 = pneg %p191
        %p438 = scmp.lt.s32.totalorder %s35, 1
        %s439 = scalar_select %p438, %s35, 1
        %s440 = scalar_lea.vmem %s6, %s439
        %p441 = pneg %p220
        %p442 = pneg %p217
        %p443 = pneg %p248
        %p444 = pneg %p245
        %s445 = sand.u32 %s235, 1
        %s446 = scalar_lea.sflag [#allocation5], %s445
        %s447 = sand.u32 %s235, 1
        %s448 = smul.addr %s447, 8
        %s449 = scalar_lea.vmem [#allocation4], %s448
        %p450 = pneg %p276
        %p451 = pneg %p273
        %s452 = sand.u32 %s31, 1
        %s453 = scalar_lea.sflag [#allocation7], %s452
        %s454 = sand.u32 %s263, 1
        %s455 = smul.addr %s454, 8
        %s456 = scalar_lea.vmem [#allocation6], %s455
        %p457 = pneg %p304
        %p458 = pneg %p301
        %s459 = sand.u32 %s31, 1
        %s460 = scalar_lea.sflag [#allocation7], %s459
        %s461 = sand.u32 %s291, 1
        %s462 = smul.addr %s461, 8
        %s463 = scalar_lea.vmem [#allocation8], %s462
        %p464 = pneg %p332
        %p465 = pneg %p329
        %s466 = sand.u32 %s319, 1
        %s467 = scalar_lea.sflag [#allocation10], %s466
        %s468 = sand.u32 %s319, 1
        %s469 = smul.addr %s468, 8
        %s470 = scalar_lea.vmem [#allocation9], %s469
        %p471 = scmp.lt.s32.totalorder %s36, 1
        %s472 = scalar_select %p471, %s36, 1
        %s473 = smul.addr %s472, 8
        %s474 = scalar_lea.vmem %s0, %s473
        %p475 = scmp.lt.s32.totalorder %s36, 1
        %s476 = scalar_select %p475, %s36, 1
        %s477 = smul.addr %s476, 8
        %s478 = scalar_lea.vmem %s1, %s477
        %p479 = scmp.lt.s32.totalorder %s36, 1
        %s480 = scalar_select %p479, %s36, 1
        %s481 = smul.addr %s480, 8
        %s482 = scalar_lea.vmem %s2, %s481
        %p483 = scmp.lt.s32.totalorder %s36, 1
        %s484 = scalar_select %p483, %s36, 1
        %s485 = smul.addr %s484, 8
        %s486 = scalar_lea.vmem %s3, %s485
        %p487 = scmp.lt.s32.totalorder %s35, 1
        %s488 = scalar_select %p487, %s35, 1
        %s489 = scalar_lea.vmem %s4, %s488
        %p490 = scmp.lt.s32.totalorder %s35, 1
        %s491 = scalar_select %p490, %s35, 1
        %s492 = scalar_lea.vmem %s5, %s491
        %p493 = scmp.lt.s32.totalorder %s35, 1
        %s494 = scalar_select %p493, %s35, 1
        %s495 = scalar_lea.vmem %s6, %s494
        %v496 = vld [vmem:[%s489] sm:$0x1]
        %v497 = vld [vmem:[%s492] sm:$0x1]
        %v498 = vld [vmem:[%s495] sm:$0x1]
        %p499 = scmp.eq.s32.totalorder %s36, 0
        // Predicated region
        $region49: #{tpu_custom_call.1} parent=47 // pred_check
          %p500 = pneg %p499
        $region50: #{tpu_custom_call.1} parent=47 // pred_check_branch
          %502 = sbr.rel (%p500) target = $region52
        $region51: #{tpu_custom_call.1} parent=47 // pred_region
          %v503 = vlaneseq
          %v504 = vshrl.u32 %v503, 7
          %v505 = vadd.s32 %v504, 8
          %v506 = vadd.s32 %v504, 16
          %v507 = vadd.s32 %v504, 24
          %v508 = vadd.s32 %v504, 32
          %v509 = vadd.s32 %v504, 40
          %v510 = vadd.s32 %v504, 48
          %v511 = vadd.s32 %v504, 56
          %v512 = vlaneseq
          %v513 = vshrl.u32 %v512, 7
          %v514 = vsub.s32 0, %v513
          %v515 = vrot.slane %v496, %v514
          %vm516 = vcmp.eq.s32.totalorder %v504, %v515
          %vm517 = vcmp.eq.s32.totalorder %v505, %v515
          %vm518 = vcmp.eq.s32.totalorder %v506, %v515
          %vm519 = vcmp.eq.s32.totalorder %v507, %v515
          %vm520 = vcmp.eq.s32.totalorder %v508, %v515
          %vm521 = vcmp.eq.s32.totalorder %v509, %v515
          %vm522 = vcmp.eq.s32.totalorder %v510, %v515
          %vm523 = vcmp.eq.s32.totalorder %v511, %v515
          %v524 = vsel %vm516, 1, 0
          %v525 = vsel %vm517, 1, 0
          %v526 = vsel %vm518, 1, 0
          %v527 = vsel %vm519, 1, 0
          %v528 = vsel %vm520, 1, 0
          %v529 = vsel %vm521, 1, 0
          %v530 = vsel %vm522, 1, 0
          %v531 = vsel %vm523, 1, 0
          %v532 = vcvt.s32.f32 %v524
          %v533 = vcvt.s32.f32 %v525
          %v534 = vcvt.s32.f32 %v526
          %v535 = vcvt.s32.f32 %v527
          %v536 = vcvt.s32.f32 %v528
          %v537 = vcvt.s32.f32 %v529
          %v538 = vcvt.s32.f32 %v530
          %v539 = vcvt.s32.f32 %v531
          %540 = vst [vmem:[#allocation2] sm:$0xff] %v532
          %541 = vst [vmem:[#allocation2 + $0x8] sm:$0xff] %v533
          %542 = vst [vmem:[#allocation2 + $0x10] sm:$0xff] %v534
          %543 = vst [vmem:[#allocation2 + $0x18] sm:$0xff] %v535
          %544 = vst [vmem:[#allocation2 + $0x20] sm:$0xff] %v536
          %545 = vst [vmem:[#allocation2 + $0x28] sm:$0xff] %v537
          %546 = vst [vmem:[#allocation2 + $0x30] sm:$0xff] %v538
          %547 = vst [vmem:[#allocation2 + $0x38] sm:$0xff] %v539
          %v548 = vlaneseq
          %v549 = vshrl.u32 %v548, 7
          %v550 = vsub.s32 0, %v549
          %v551 = vrot.slane %v497, %v550
          %vm552 = vcmp.eq.s32.totalorder %v504, %v551
          %vm553 = vcmp.eq.s32.totalorder %v505, %v551
          %vm554 = vcmp.eq.s32.totalorder %v506, %v551
          %vm555 = vcmp.eq.s32.totalorder %v507, %v551
          %vm556 = vcmp.eq.s32.totalorder %v508, %v551
          %vm557 = vcmp.eq.s32.totalorder %v509, %v551
          %vm558 = vcmp.eq.s32.totalorder %v510, %v551
          %vm559 = vcmp.eq.s32.totalorder %v511, %v551
          %v560 = vsel %vm552, 1, 0
          %v561 = vsel %vm553, 1, 0
          %v562 = vsel %vm554, 1, 0
          %v563 = vsel %vm555, 1, 0
          %v564 = vsel %vm556, 1, 0
          %v565 = vsel %vm557, 1, 0
          %v566 = vsel %vm558, 1, 0
          %v567 = vsel %vm559, 1, 0
          %v568 = vcvt.s32.f32 %v560
          %v569 = vcvt.s32.f32 %v561
          %v570 = vcvt.s32.f32 %v562
          %v571 = vcvt.s32.f32 %v563
          %v572 = vcvt.s32.f32 %v564
          %v573 = vcvt.s32.f32 %v565
          %v574 = vcvt.s32.f32 %v566
          %v575 = vcvt.s32.f32 %v567
          %576 = vst [vmem:[#allocation3] sm:$0xff] %v568
          %577 = vst [vmem:[#allocation3 + $0x8] sm:$0xff] %v569
          %578 = vst [vmem:[#allocation3 + $0x10] sm:$0xff] %v570
          %579 = vst [vmem:[#allocation3 + $0x18] sm:$0xff] %v571
          %580 = vst [vmem:[#allocation3 + $0x20] sm:$0xff] %v572
          %581 = vst [vmem:[#allocation3 + $0x28] sm:$0xff] %v573
          %582 = vst [vmem:[#allocation3 + $0x30] sm:$0xff] %v574
          %583 = vst [vmem:[#allocation3 + $0x38] sm:$0xff] %v575
        $region52: #{tpu_custom_call.1} parent=47 // pred_fallthru
          _
        %v584 = vld [vmem:[%s486] sm:$0xff]
        %v585 = vld [vmem:[#allocation2] sm:$0xff]
        %v586 = vld [vmem:[#allocation2 + $0x8] sm:$0xff]
        %v587 = vld [vmem:[#allocation2 + $0x10] sm:$0xff]
        %v588 = vld [vmem:[#allocation2 + $0x18] sm:$0xff]
        %v589 = vld [vmem:[#allocation2 + $0x20] sm:$0xff]
        %v590 = vld [vmem:[#allocation2 + $0x28] sm:$0xff]
        %v591 = vld [vmem:[#allocation2 + $0x30] sm:$0xff]
        %v592 = vld [vmem:[#allocation2 + $0x38] sm:$0xff]
        %vm593 = vcmask 523264
        %v595 = vsel %vm593, %v584, 0
        %597 = vmatprep.subr.mxu0 0.0
        %598 = vmatpush1.msra.mxu0 %v585
        %599 = vmatprep.subr.mxu0 0.0
        %600 = vmatpush1.msra.mxu0 %v586
        %601 = vmatprep.subr.mxu0 0.0
        %602 = vmatpush1.msra.mxu0 %v587
        %603 = vmatprep.subr.mxu0 0.0
        %604 = vmatpush1.msra.mxu0 %v588
        %605 = vmatprep.subr.mxu0 0.0
        %606 = vmatpush1.msra.mxu0 %v589
        %607 = vmatprep.subr.mxu0 0.0
        %608 = vmatpush1.msra.mxu0 %v590
        %609 = vmatprep.subr.mxu0 0.0
        %610 = vmatpush1.msra.mxu0 %v591
        %611 = vmatprep.subr.mxu0 0.0
        %612 = vmatpush1.msra.mxu0 %v592
        %613 = vmatprep.subr.mxu0 0.0
        %614 = vmatpush1.msra.mxu0 0.0
        %615 = vmatprep.subr.mxu0 0.0
        %616 = vmatpush1.msra.mxu0 0.0
        %617 = vmatprep.subr.mxu0 0.0
        %618 = vmatpush1.msra.mxu0 0.0
        %619 = vmatprep.subr.mxu0 0.0
        %620 = vmatpush1.msra.mxu0 0.0
        %621 = vmatprep.subr.mxu0 0.0
        %622 = vmatpush1.msra.mxu0 0.0
        %623 = vmatprep.subr.mxu0 0.0
        %624 = vmatpush1.msra.mxu0 0.0
        %625 = vmatprep.subr.mxu0 0.0
        %626 = vmatpush1.msra.mxu0 0.0
        %627 = vmatprep.subr.mxu0 0.0
        %628 = vmatpush1.msra.mxu0 0.0
        %629 = vmatprep.subr.mxu0 0.0
        %630 = vmatpush1.msra.mxu0 0.0
        %631 = vmatprep.subr.mxu0 0.0
        %632 = vmatpush1.msra.mxu0 0.0
        %633 = vmatprep.subr.mxu0 0.0
        %634 = vmatpush1.msra.mxu0 0.0
        %635 = vmatprep.subr.mxu0 0.0
        %636 = vmatpush1.msra.mxu0 0.0
        %637 = vmatprep.subr.mxu0 0.0
        %638 = vmatpush1.msra.mxu0 0.0
        %639 = vmatprep.subr.mxu0 0.0
        %640 = vmatpush1.msra.mxu0 0.0
        %641 = vmatprep.subr.mxu0 0.0
        %642 = vmatpush1.msra.mxu0 0.0
        %643 = vmatprep.subr.mxu0 0.0
        %644 = vmatpush1.msra.mxu0 0.0
        %645 = vmatprep.subr.mxu0 0.0
        %646 = vmatpush1.msra.mxu0 0.0
        %647 = vmatprep.subr.mxu0 0.0
        %648 = vmatpush1.msra.mxu0 0.0
        %649 = vmatprep.subr.mxu0 0.0
        %650 = vmatpush1.msra.mxu0 0.0
        %651 = vmatprep.subr.mxu0 0.0
        %652 = vmatpush1.msra.mxu0 0.0
        %653 = vmatprep.subr.mxu0 0.0
        %654 = vmatpush1.msra.mxu0 0.0
        %655 = vmatprep.subr.mxu0 0.0
        %656 = vmatpush1.msra.mxu0 0.0
        %657 = vmatprep.subr.mxu0 0.0
        %658 = vmatpush1.msra.mxu0 0.0
        %659 = vmatprep.subr.mxu0 0.0
        %660 = vmatpush1.msra.mxu0 0.0
        %661 = vmatprep.mubr.f32.mxu0 0.0
        %662 = vmatmul.mubr.f32.gmra.mrb[0].mxu0 %v595
        %v663 = vpop.f32.mrb[0].mxu0
        %v664 = vadd.f32 0.0, %v663
        %v665 = vpop.f32.mrb[0].mxu0
        %666 = vdwg.mxu0
        %v667 = vld [vmem:[#allocation3] sm:$0xff]
        %v668 = vld [vmem:[#allocation3 + $0x8] sm:$0xff]
        %v669 = vld [vmem:[#allocation3 + $0x10] sm:$0xff]
        %v670 = vld [vmem:[#allocation3 + $0x18] sm:$0xff]
        %v671 = vld [vmem:[#allocation3 + $0x20] sm:$0xff]
        %v672 = vld [vmem:[#allocation3 + $0x28] sm:$0xff]
        %v673 = vld [vmem:[#allocation3 + $0x30] sm:$0xff]
        %v674 = vld [vmem:[#allocation3 + $0x38] sm:$0xff]
        %675 = vmatprep.subr.mxu0 0.0
        %676 = vmatpush1.msra.mxu0 %v667
        %677 = vmatprep.subr.mxu0 0.0
        %678 = vmatpush1.msra.mxu0 %v668
        %679 = vmatprep.subr.mxu0 0.0
        %680 = vmatpush1.msra.mxu0 %v669
        %681 = vmatprep.subr.mxu0 0.0
        %682 = vmatpush1.msra.mxu0 %v670
        %683 = vmatprep.subr.mxu0 0.0
        %684 = vmatpush1.msra.mxu0 %v671
        %685 = vmatprep.subr.mxu0 0.0
        %686 = vmatpush1.msra.mxu0 %v672
        %687 = vmatprep.subr.mxu0 0.0
        %688 = vmatpush1.msra.mxu0 %v673
        %689 = vmatprep.subr.mxu0 0.0
        %690 = vmatpush1.msra.mxu0 %v674
        %691 = vmatprep.subr.mxu0 0.0
        %692 = vmatpush1.msra.mxu0 0.0
        %693 = vmatprep.subr.mxu0 0.0
        %694 = vmatpush1.msra.mxu0 0.0
        %695 = vmatprep.subr.mxu0 0.0
        %696 = vmatpush1.msra.mxu0 0.0
        %697 = vmatprep.subr.mxu0 0.0
        %698 = vmatpush1.msra.mxu0 0.0
        %699 = vmatprep.subr.mxu0 0.0
        %700 = vmatpush1.msra.mxu0 0.0
        %701 = vmatprep.subr.mxu0 0.0
        %702 = vmatpush1.msra.mxu0 0.0
        %703 = vmatprep.subr.mxu0 0.0
        %704 = vmatpush1.msra.mxu0 0.0
        %705 = vmatprep.subr.mxu0 0.0
        %706 = vmatpush1.msra.mxu0 0.0
        %707 = vmatprep.subr.mxu0 0.0
        %708 = vmatpush1.msra.mxu0 0.0
        %709 = vmatprep.subr.mxu0 0.0
        %710 = vmatpush1.msra.mxu0 0.0
        %711 = vmatprep.subr.mxu0 0.0
        %712 = vmatpush1.msra.mxu0 0.0
        %713 = vmatprep.subr.mxu0 0.0
        %714 = vmatpush1.msra.mxu0 0.0
        %715 = vmatprep.subr.mxu0 0.0
        %716 = vmatpush1.msra.mxu0 0.0
        %717 = vmatprep.subr.mxu0 0.0
        %718 = vmatpush1.msra.mxu0 0.0
        %719 = vmatprep.subr.mxu0 0.0
        %720 = vmatpush1.msra.mxu0 0.0
        %721 = vmatprep.subr.mxu0 0.0
        %722 = vmatpush1.msra.mxu0 0.0
        %723 = vmatprep.subr.mxu0 0.0
        %724 = vmatpush1.msra.mxu0 0.0
        %725 = vmatprep.subr.mxu0 0.0
        %726 = vmatpush1.msra.mxu0 0.0
        %727 = vmatprep.subr.mxu0 0.0
        %728 = vmatpush1.msra.mxu0 0.0
        %729 = vmatprep.subr.mxu0 0.0
        %730 = vmatpush1.msra.mxu0 0.0
        %731 = vmatprep.subr.mxu0 0.0
        %732 = vmatpush1.msra.mxu0 0.0
        %733 = vmatprep.subr.mxu0 0.0
        %734 = vmatpush1.msra.mxu0 0.0
        %735 = vmatprep.subr.mxu0 0.0
        %736 = vmatpush1.msra.mxu0 0.0
        %737 = vmatprep.subr.mxu0 0.0
        %738 = vmatpush1.msra.mxu0 0.0
        %739 = vmatprep.mubr.f32.mxu0 0.0
        %740 = vmatmul.mubr.f32.gmra.mrb[0].mxu0 %v595
        %v741 = vpop.f32.mrb[0].mxu0
        %v742 = vadd.f32 0.0, %v741
        %v743 = vpop.f32.mrb[0].mxu0
        %744 = vdwg.mxu0
        %vm745 = vcmp.ge.f32.partialorder %v664, 64.0
        %vm746 = vcmp.ge.f32.partialorder %v742, 64.0
        %v747 = vsub.f32 %v664, 65.0
        %v748 = vcvt.f32.s32.to.zero.pseudo %v747
        %v749 = vsub.f32 %v742, 65.0
        %v750 = vcvt.f32.s32.to.zero.pseudo %v749
        %v751 = vld [vmem:[%s474] sm:$0xff]
        %v752 = vld [vmem:[%s478] sm:$0xff]
        %v753 = vld [vmem:[%s482] sm:$0xff]
        %v754 = vlaneseq
        %v755 = vshrl.u32 %v754, 7
        %v756 = vsub.s32 0, %v755
        %v757 = vrot.slane %v496, %v756
        %758 = vset.pattern.permute.xlu0 0
        %759 = vperm.xlu0 %758, %v751
        %v760 = vpop.permute.xlu0 %759
        %vm761 = vcmp.eq.s32.totalorder %v757, %v760
        %v762 = vlaneseq
        %v763 = vshrl.u32 %v762, 7
        %v764 = vsub.s32 0, %v763
        %v765 = vrot.slane %v497, %v764
        %766 = vset.pattern.permute.xlu0 0
        %767 = vperm.xlu0 %766, %v752
        %v768 = vpop.permute.xlu0 %767
        %vm769 = vcmp.eq.s32.totalorder %v765, %v768
        %vm770 = vmand %vm761, %vm769
        %v771 = vlaneseq
        %v772 = vshrl.u32 %v771, 7
        %v773 = vsub.s32 0, %v772
        %v774 = vrot.slane %v498, %v773
        %775 = vset.pattern.permute.xlu0 0
        %776 = vperm.xlu0 %775, %v753
        %v777 = vpop.permute.xlu0 %776
        %vm778 = vcmp.eq.s32.totalorder %v774, %v777
        %vm779 = vmand %vm770, %vm778
        %vm780 = vmand %vm745, %vm746
        %vm781 = vmxor %vm779, 1
        %vm782 = vmand %vm780, %vm781
        %v783 = vsel %vm782, 1, 0
        %784 = vst [vmem:[%s449] sm:$0xff] %v783
        %v785 = vsel %vm782, %v748, 4294967295
        %786 = vst [vmem:[%s456] sm:$0xff] %v785
        %v787 = vsel %vm782, %v750, 4294967295
        %788 = vst [vmem:[%s463] sm:$0xff] %v787
        %v789 = vsel %vm782, %v774, 4294967295
        %790 = vst [vmem:[%s470] sm:$0xff] %v789
        %s791 = sand.u32 %s235, 1
        %s792 = scalar_lea.sflag [#allocation5], %s791
        %s793 = sand.u32 %s235, 1
        %s794 = smul.addr %s793, 8
        %s795 = scalar_lea.vmem [#allocation4], %s794
        %s796 = sand.u32 %s31, 1
        %s797 = scalar_lea.sflag [#allocation7], %s796
        %s798 = sand.u32 %s263, 1
        %s799 = smul.addr %s798, 8
        %s800 = scalar_lea.vmem [#allocation6], %s799
        %s801 = sand.u32 %s31, 1
        %s802 = scalar_lea.sflag [#allocation7], %s801
        %s803 = sand.u32 %s291, 1
        %s804 = smul.addr %s803, 8
        %s805 = scalar_lea.vmem [#allocation8], %s804
        %s806 = sand.u32 %s319, 1
        %s807 = scalar_lea.sflag [#allocation10], %s806
        %s808 = sand.u32 %s319, 1
        %s809 = smul.addr %s808, 8
        %s810 = scalar_lea.vmem [#allocation9], %s809
        // Predicated region
        $region53: #{tpu_custom_call.1} parent=47 // pred_check
          %p811 = pneg %p245
        $region54: #{tpu_custom_call.1} parent=47 // pred_check_branch
          %813 = sbr.rel (%p811) target = $region56
        $region55: #{tpu_custom_call.1} parent=47 // pred_region
          %s815 = ssub.s32 128, 128
          %816 = vsyncadd %s792, %s815
          %s817 = smul.addr %s36, 2
          %s818 = sadd.s32 %s35, %s817
          %s819 = smul.addr %s818, 128
          %s820 = scalar_lea.hbm %s7, %s819
          %s822 = sshll.u32 %s795, 4
          %s823 = int_to_ptr.vmem [resolvable:$true] %s822
          %825 = dma.vmem_to_hbm [thread:$0]  %s823, 128, %s820, %s792
        $region56: #{tpu_custom_call.1} parent=47 // pred_fallthru
          _
        // Predicated region
        $region57: #{tpu_custom_call.1} parent=47 // pred_check
          %p826 = pneg %p273
        $region58: #{tpu_custom_call.1} parent=47 // pred_check_branch
          %828 = sbr.rel (%p826) target = $region60
        $region59: #{tpu_custom_call.1} parent=47 // pred_region
          %s830 = ssub.s32 128, 128
          %831 = vsyncadd %s797, %s830
          %s832 = smul.addr %s36, 2
          %s833 = sadd.s32 %s35, %s832
          %s834 = smul.addr %s833, 128
          %s835 = scalar_lea.hbm %s8, %s834
          %s837 = sshll.u32 %s800, 4
          %s838 = int_to_ptr.vmem [resolvable:$true] %s837
          %840 = dma.vmem_to_hbm [thread:$0]  %s838, 128, %s835, %s797
        $region60: #{tpu_custom_call.1} parent=47 // pred_fallthru
          _
        // Predicated region
        $region61: #{tpu_custom_call.1} parent=47 // pred_check
          %p841 = pneg %p301
        $region62: #{tpu_custom_call.1} parent=47 // pred_check_branch
          %843 = sbr.rel (%p841) target = $region64
        $region63: #{tpu_custom_call.1} parent=47 // pred_region
          %s845 = ssub.s32 128, 128
          %846 = vsyncadd %s802, %s845
          %s847 = smul.addr %s36, 2
          %s848 = sadd.s32 %s35, %s847
          %s849 = smul.addr %s848, 128
          %s850 = scalar_lea.hbm %s9, %s849
          %s852 = sshll.u32 %s805, 4
          %s853 = int_to_ptr.vmem [resolvable:$true] %s852
          %855 = dma.vmem_to_hbm [thread:$0]  %s853, 128, %s850, %s802
        $region64: #{tpu_custom_call.1} parent=47 // pred_fallthru
          _
        // Predicated region
        $region65: #{tpu_custom_call.1} parent=47 // pred_check
          %p856 = pneg %p329
        $region66: #{tpu_custom_call.1} parent=47 // pred_check_branch
          %858 = sbr.rel (%p856) target = $region68
        $region67: #{tpu_custom_call.1} parent=47 // pred_region
          %s860 = ssub.s32 128, 128
          %861 = vsyncadd %s807, %s860
          %s862 = smul.addr %s36, 2
          %s863 = sadd.s32 %s35, %s862
          %s864 = smul.addr %s863, 128
          %s865 = scalar_lea.hbm %s10, %s864
          %s867 = sshll.u32 %s810, 4
          %s868 = int_to_ptr.vmem [resolvable:$true] %s867
          %870 = dma.vmem_to_hbm [thread:$0]  %s868, 128, %s865, %s807
        $region68: #{tpu_custom_call.1} parent=47 // pred_fallthru
          _
      $region48: #{tpu_custom_call.1} parent=5 // pred_fallthru
        _
      %p871 = scmp.le.s32.totalorder 2, %s26
      // Predicated region
      $region69: #{tpu_custom_call.1} parent=5 // pred_check
        %p872 = pneg %p871
      $region70: #{tpu_custom_call.1} parent=5 // pred_check_branch
        %874 = sbr.rel (%p872) target = $region72
      $region71: #{tpu_custom_call.1} parent=5 // pred_region
        %s875 = ssub.s32 %s26, 2
        // Predicated region
        $region73: #{tpu_custom_call.1} parent=71 // pred_check
          %p876 = pneg %p251
        $region74: #{tpu_custom_call.1} parent=71 // pred_check_branch
          %878 = sbr.rel (%p876) target = $region76
        $region75: #{tpu_custom_call.1} parent=71 // pred_region
          %s879 = sand.u32 %s236, 1
          %s880 = scalar_lea.sflag [#allocation5], %s879
          %s881 = sand.u32 %s236, 1
          %s882 = smul.addr %s881, 8
          %s883 = scalar_lea.vmem [#allocation4], %s882
          %884 = dma.done %s880, 128
        $region76: #{tpu_custom_call.1} parent=71 // pred_fallthru
          _
        // Predicated region
        $region77: #{tpu_custom_call.1} parent=71 // pred_check
          %p885 = pneg %p279
        $region78: #{tpu_custom_call.1} parent=71 // pred_check_branch
          %887 = sbr.rel (%p885) target = $region80
        $region79: #{tpu_custom_call.1} parent=71 // pred_region
          %s888 = sand.u32 %s32, 1
          %s889 = scalar_lea.sflag [#allocation7], %s888
          %s890 = sand.u32 %s264, 1
          %s891 = smul.addr %s890, 8
          %s892 = scalar_lea.vmem [#allocation6], %s891
          %893 = dma.done %s889, 128
        $region80: #{tpu_custom_call.1} parent=71 // pred_fallthru
          _
        // Predicated region
        $region81: #{tpu_custom_call.1} parent=71 // pred_check
          %p894 = pneg %p307
        $region82: #{tpu_custom_call.1} parent=71 // pred_check_branch
          %896 = sbr.rel (%p894) target = $region84
        $region83: #{tpu_custom_call.1} parent=71 // pred_region
          %s897 = sand.u32 %s32, 1
          %s898 = scalar_lea.sflag [#allocation7], %s897
          %s899 = sand.u32 %s292, 1
          %s900 = smul.addr %s899, 8
          %s901 = scalar_lea.vmem [#allocation8], %s900
          %902 = dma.done %s898, 128
        $region84: #{tpu_custom_call.1} parent=71 // pred_fallthru
          _
        // Predicated region
        $region85: #{tpu_custom_call.1} parent=71 // pred_check
          %p903 = pneg %p335
        $region86: #{tpu_custom_call.1} parent=71 // pred_check_branch
          %905 = sbr.rel (%p903) target = $region88
        $region87: #{tpu_custom_call.1} parent=71 // pred_region
          %s906 = sand.u32 %s320, 1
          %s907 = scalar_lea.sflag [#allocation10], %s906
          %s908 = sand.u32 %s320, 1
          %s909 = smul.addr %s908, 8
          %s910 = scalar_lea.vmem [#allocation9], %s909
          %911 = dma.done %s907, 128
        $region88: #{tpu_custom_call.1} parent=71 // pred_fallthru
          _
      $region72: #{tpu_custom_call.1} parent=5 // pred_fallthru
        _
    $region6: #{tpu_custom_call.1} parent=1 // loop_footer
      %s30 = sadd.s32 1, %s26
    $region7: #{tpu_custom_call.1} parent=1 // loop_footer_branch
      %25 = sbr.rel target = $region3
    $region8: #{tpu_custom_call.1} parent=1 // loop_exit
      _
    %912 = vsyncpa [#allocation5], 1
    %s913 = scalar_lea.sflag [#allocation5], 1
    %914 = vsyncpa %s913, 1
    %915 = vsyncpa [#allocation7], 1
    %s916 = scalar_lea.sflag [#allocation7], 1
    %917 = vsyncpa %s916, 1
    %918 = vsyncpa [#allocation10], 1
    %s919 = scalar_lea.sflag [#allocation10], 1
    %920 = vsyncpa %s919, 1

</llo_original>
